<compile_context>
chip_gen: v6e
topology: v6e:2x2x1
jax: 0.10.0
libtpu: 0.0.40
codegen_flags: <defaults>
</compile_context>

<pallas_src>
import functools

import jax
import jax.numpy as jnp
from jax.experimental import pallas as pl
from jax.experimental.pallas import tpu as pltpu

_LANE = 128
_SUBLANE = 8
_VMEM_LIMIT = 48 * 1024 * 1024          # scoped VMEM request (safe on v5e/v6e/v7x)
_TILE_BUDGET = 24 * 1024 * 1024         # working-set target when picking row tiles
_FUSED_BUDGET = 16 * 1024 * 1024        # threshold for the all-layer fused path


# --------------------------------------------------------------------------
# helpers
# --------------------------------------------------------------------------
def _round_up(x, m):
    return ((x + m - 1) // m) * m


def _pad2d(x, rows, cols):
    r, c = x.shape
    if r == rows and c == cols:
        return x
    return jnp.pad(x, ((0, rows - r), (0, cols - c)))


def _choose_row_tile(n_pad, resident_bytes, per_row_bytes, budget=_TILE_BUDGET):
    """Largest row tile (multiple of 16) whose double-buffered working set fits."""
    avail = max(budget - resident_bytes, 0)
    tm = int(avail // max(per_row_bytes, 1))
    tm = (tm // 16) * 16                  # keep bf16 sublane tiling happy
    tm = max(tm, 16)
    tm = min(tm, 1024)
    if tm >= n_pad:
        return n_pad
    return tm


def _compiler_params(semantics):
    return pltpu.CompilerParams(
        dimension_semantics=semantics,
        vmem_limit_bytes=_VMEM_LIMIT,
    )


# --------------------------------------------------------------------------
# kernels
# --------------------------------------------------------------------------
def _gcn_layer_fused_kernel(a_ref, h_ref, w_ref, b_ref, alpha_ref, o_ref):
    # (A_tile @ H) @ W   -- used when f_in <= f_out
    ah = jnp.dot(a_ref[...], h_ref[...], preferred_element_type=jnp.float32)
    z = jnp.dot(ah.astype(jnp.bfloat16), w_ref[...],
                preferred_element_type=jnp.float32)
    z = z + b_ref[...]
    o_ref[...] = jnp.where(z > 0.0, z, alpha_ref[...] * z)


def _gcn_layer_agg_kernel(a_ref, hp_ref, b_ref, alpha_ref, o_ref):
    # A_tile @ (H @ W)   -- aggregation after the projection kernel (f_in > f_out)
    z = jnp.dot(a_ref[...], hp_ref[...], preferred_element_type=jnp.float32)
    z = z + b_ref[...]
    o_ref[...] = jnp.where(z > 0.0, z, alpha_ref[...] * z)


def _proj_kernel(h_ref, w_ref, o_ref):
    # H_tile @ W  (row-tiled dense projection, bf16 MXU, f32 accumulate)
    o_ref[...] = jnp.dot(h_ref[...], w_ref[...],
                         preferred_element_type=jnp.float32).astype(o_ref.dtype)


def _gcn_stack_kernel(n_layers, a_ref, x_ref, w_ref, b_ref, alpha_ref,
                      o_ref, h_scr):
    # All layers fused in one kernel; H stays in VMEM scratch between layers.
    h_scr[...] = x_ref[...]
    for l in range(n_layers):                     # static unrolled loop
        h_bf = h_scr[...].astype(jnp.bfloat16)
        ah = jnp.dot(a_ref[...], h_bf, preferred_element_type=jnp.float32)
        z = jnp.dot(ah.astype(jnp.bfloat16), w_ref[l],
                    preferred_element_type=jnp.float32)
        z = z + b_ref[l]
        h_scr[...] = jnp.where(z > 0.0, z, alpha_ref[l] * z)
    o_ref[...] = h_scr[...]


# --------------------------------------------------------------------------
# pallas_call wrappers
# --------------------------------------------------------------------------
def _project(h_bf, w_bf):
    n_pad, f_in_p = h_bf.shape
    f_out_p = w_bf.shape[1]
    resident = 2 * f_in_p * f_out_p * 2
    per_row = 2 * f_in_p * 2 + 2 * f_out_p * 2
    tm = _choose_row_tile(n_pad, resident, per_row)
    return pl.pallas_call(
        _proj_kernel,
        out_shape=jax.ShapeDtypeStruct((n_pad, f_out_p), jnp.bfloat16),
        grid_spec=pltpu.PrefetchScalarGridSpec(
            num_scalar_prefetch=0,
            grid=(pl.cdiv(n_pad, tm),),
            in_specs=[
                pl.BlockSpec((tm, f_in_p), lambda i: (i, 0)),
                pl.BlockSpec((f_in_p, f_out_p), lambda i: (0, 0)),
            ],
            out_specs=pl.BlockSpec((tm, f_out_p), lambda i: (i, 0)),
        ),
        compiler_params=_compiler_params(("parallel",)),
    )(h_bf, w_bf)


def _aggregate(a_bf, hp_bf, b_pad, alpha_pad):
    n_pad = a_bf.shape[0]
    f_out_p = hp_bf.shape[1]
    resident = 2 * n_pad * f_out_p * 2 + 4 * f_out_p * 4
    per_row = 2 * n_pad * 2 + 2 * f_out_p * 4
    tm = _choose_row_tile(n_pad, resident, per_row)
    return pl.pallas_call(
        _gcn_layer_agg_kernel,
        out_shape=jax.ShapeDtypeStruct((n_pad, f_out_p), jnp.float32),
        grid_spec=pltpu.PrefetchScalarGridSpec(
            num_scalar_prefetch=0,
            grid=(pl.cdiv(n_pad, tm),),
            in_specs=[
                pl.BlockSpec((tm, n_pad), lambda i: (i, 0)),
                pl.BlockSpec((n_pad, f_out_p), lambda i: (0, 0)),
                pl.BlockSpec((1, f_out_p), lambda i: (0, 0)),
                pl.BlockSpec((1, f_out_p), lambda i: (0, 0)),
            ],
            out_specs=pl.BlockSpec((tm, f_out_p), lambda i: (i, 0)),
        ),
        compiler_params=_compiler_params(("parallel",)),
    )(a_bf, hp_bf, b_pad, alpha_pad)


def gcn_layer(a_bf, h_pad_f32, w_bf, b_pad, alpha_pad):
    """One GraphConv layer on padded inputs: PReLU(A_hat @ H @ W + b)."""
    n_pad = a_bf.shape[0]
    f_in_p, f_out_p = w_bf.shape
    h_bf = h_pad_f32.astype(jnp.bfloat16)

    if f_in_p > f_out_p:
        # cheaper to project first:  A @ (H @ W)
        hp = _project(h_bf, w_bf)
        return _aggregate(a_bf, hp, b_pad, alpha_pad)

    # (A @ H) @ W, row-tiled over nodes
    resident = 2 * n_pad * f_in_p * 2 + 2 * f_in_p * f_out_p * 2 + 4 * f_out_p * 4
    per_row = 2 * n_pad * 2 + 2 * f_out_p * 4
    tm = _choose_row_tile(n_pad, resident, per_row)
    return pl.pallas_call(
        _gcn_layer_fused_kernel,
        out_shape=jax.ShapeDtypeStruct((n_pad, f_out_p), jnp.float32),
        grid_spec=pltpu.PrefetchScalarGridSpec(
            num_scalar_prefetch=0,
            grid=(pl.cdiv(n_pad, tm),),
            in_specs=[
                pl.BlockSpec((tm, n_pad), lambda i: (i, 0)),
                pl.BlockSpec((n_pad, f_in_p), lambda i: (0, 0)),
                pl.BlockSpec((f_in_p, f_out_p), lambda i: (0, 0)),
                pl.BlockSpec((1, f_out_p), lambda i: (0, 0)),
                pl.BlockSpec((1, f_out_p), lambda i: (0, 0)),
            ],
            out_specs=pl.BlockSpec((tm, f_out_p), lambda i: (i, 0)),
        ),
        compiler_params=_compiler_params(("parallel",)),
    )(a_bf, h_bf, w_bf, b_pad, alpha_pad)


def gcn_stack_small(a_bf, x_pad, w_stack, b_stack, alpha_stack):
    """All GCN layers in one pallas_call (small graphs, H held in VMEM scratch)."""
    n_pad = a_bf.shape[0]
    n_layers, f_pad, _ = w_stack.shape
    kernel = functools.partial(_gcn_stack_kernel, n_layers)
    return pl.pallas_call(
        kernel,
        out_shape=jax.ShapeDtypeStruct((n_pad, f_pad), jnp.float32),
        grid_spec=pltpu.PrefetchScalarGridSpec(
            num_scalar_prefetch=0,
            grid=(1,),
            in_specs=[
                pl.BlockSpec((n_pad, n_pad), lambda i: (0, 0)),
                pl.BlockSpec((n_pad, f_pad), lambda i: (0, 0)),
                pl.BlockSpec((n_layers, f_pad, f_pad), lambda i: (0, 0, 0)),
                pl.BlockSpec((n_layers, 1, f_pad), lambda i: (0, 0, 0)),
                pl.BlockSpec((n_layers, 1, f_pad), lambda i: (0, 0, 0)),
            ],
            out_specs=pl.BlockSpec((n_pad, f_pad), lambda i: (0, 0)),
            scratch_shapes=[pltpu.VMEM((n_pad, f_pad), jnp.float32)],
        ),
        compiler_params=_compiler_params(("arbitrary",)),
    )(a_bf, x_pad, w_stack, b_stack, alpha_stack)


# --------------------------------------------------------------------------
# parameters / graph glue (plain JAX)
# --------------------------------------------------------------------------
def init_encoder_params(key, in_feats, n_hidden, n_layers):
    """Glorot-uniform weights, zero bias, PReLU alpha=0.25 (PyTorch defaults)."""
    params = []
    dims = [in_feats] + [n_hidden] * n_layers
    for li in range(n_layers):
        key, wk = jax.random.split(key)
        fan_in, fan_out = dims[li], dims[li + 1]
        limit = (6.0 / (fan_in + fan_out)) ** 0.5
        w = jax.random.uniform(wk, (fan_in, fan_out), jnp.float32, -limit, limit)
        b = jnp.zeros((fan_out,), jnp.float32)
        alpha = jnp.full((fan_out,), 0.25, jnp.float32)   # nn.PReLU(n_hidden) init
        params.append((w, b, alpha))
    return params


def _prepare_params(params):
    """Pad per-layer params to lane-dense (multiple-of-128) widths; W in bf16."""
    prepared = []
    for (w, b, alpha) in params:
        f_in, f_out = w.shape
        f_in_p = _round_up(f_in, _LANE)
        f_out_p = _round_up(f_out, _LANE)
        w_p = _pad2d(w, f_in_p, f_out_p).astype(jnp.bfloat16)
        b_p = _pad2d(b.reshape(1, f_out), 1, f_out_p)          # f32 epilogue
        a_p = _pad2d(alpha.reshape(1, f_out), 1, f_out_p)      # f32 epilogue
        prepared.append((w_p, b_p, a_p, f_out))
    return prepared


def normalize_adjacency(adj):
    """Symmetric normalization D^{-1/2}(A + I)D^{-1/2} (DGL norm='both' + self loops)."""
    n = adj.shape[0]
    a = adj + jnp.eye(n, dtype=adj.dtype)
    deg = jnp.sum(a, axis=1)
    d_inv_sqrt = jnp.where(deg > 0, deg ** -0.5, 0.0)
    return a * d_inv_sqrt[:, None] * d_inv_sqrt[None, :]


def encoder_forward(features, a_hat, params, corrupt=False, key=None,
                    allow_fused=True):
    """Encoder.forward: optional row permutation, then stacked GCN layers."""
    n, _ = features.shape
    h = features
    if corrupt:
        # TODO(synk): jax.random.permutation will not reproduce torch.randperm order.
        perm = jax.random.permutation(key, n)
        h = h[perm]

    prepared = _prepare_params(params)
    n_pad = _round_up(n, _SUBLANE)
    f_in_p0 = prepared[0][0].shape[0]

    # adjacency stored / streamed in bf16 (dominant HBM traffic)
    a_pad = _pad2d(a_hat.astype(jnp.float32), n_pad, n_pad).astype(jnp.bfloat16)
    h_pad = _pad2d(h.astype(jnp.float32), n_pad, f_in_p0)

    shapes = [p[0].shape for p in prepared]
    square_uniform = all(s[0] == s[1] == shapes[0][0] for s in shapes)
    f_pad = shapes[0][1]
    fused_bytes = (2 * n_pad * n_pad * 2            # bf16 A (double buffered)
                   + 4 * n_pad * f_pad * 4          # x, out, H scratch (f32)
                   + 2 * sum(s[0] * s[1] * 2 for s in shapes))

    if allow_fused and square_uniform and fused_bytes <= _FUSED_BUDGET:
        # small graph: fuse all layers into one pallas_call
        w_stack = jnp.stack([p[0] for p in prepared])
        b_stack = jnp.stack([p[1] for p in prepared])
        alpha_stack = jnp.stack([p[2] for p in prepared])
        out_pad = gcn_stack_small(a_pad, h_pad, w_stack, b_stack, alpha_stack)
    else:
        cur = h_pad
        for (w_p, b_p, alpha_p, _) in prepared:
            cur = gcn_layer(a_pad, cur, w_p, b_p, alpha_p)
        out_pad = cur

    return out_pad[:n, :prepared[-1][3]]


def encoder_reference(features, a_hat, params, corrupt=False, key=None):
    """Pure-JAX f32 reference for validation."""
    h = features
    if corrupt:
        perm = jax.random.permutation(key, features.shape[0])
        h = h[perm]
    for (w, b, alpha) in params:
        z = a_hat @ (h @ w) + b.reshape(1, -1)
        h = jnp.where(z > 0, z, alpha.reshape(1, -1) * z)
    return h


def _assert_close(got, want, tol=0.08, name=""):
    scale = float(jnp.max(jnp.abs(want))) + 1e-6
    err = float(jnp.max(jnp.abs(got - want)))
    assert err <= tol * scale, f"{name}: max err {err:.4e} vs scale {scale:.4e}"


# --------------------------------------------------------------------------
# demo / self-test
# --------------------------------------------------------------------------
if __name__ == "__main__":
    key = jax.random.PRNGKey(0)
    k_feat, k_adj, k_param, k_feat2, k_adj2, k_param2 = jax.random.split(key, 6)

    # config consistent with the original module (small demo shapes)
    N, IN_FEATS, N_HIDDEN, N_LAYERS = 16, 8, 32, 2

    features = jax.random.normal(k_feat, (N, IN_FEATS), jnp.float32)
    rand = jax.random.uniform(k_adj, (N, N))
    adj = ((rand + rand.T) * 0.5 > 0.6).astype(jnp.float32)
    adj = adj * (1.0 - jnp.eye(N))          # no pre-existing self loops
    a_hat = normalize_adjacency(adj)
    params = init_encoder_params(k_param, IN_FEATS, N_HIDDEN, N_LAYERS)

    ref = encoder_reference(features, a_hat, params)

    # 1) small-graph fused path (single pallas_call for all layers)
    out_fused = jax.block_until_ready(encoder_forward(features, a_hat, params))
    assert out_fused.shape == (N, N_HIDDEN)
    _assert_close(out_fused, ref, name="fused-stack")

    # 2) general row-tiled per-layer path ((A@H)@W kernel)
    out_tiled = jax.block_until_ready(
        encoder_forward(features, a_hat, params, allow_fused=False))
    _assert_close(out_tiled, ref, name="row-tiled")

    # 3) wide-input config exercising the project-then-aggregate (A@(H@W)) path
    N2, IN2, HID2 = 24, 200, 32
    feat2 = jax.random.normal(k_feat2, (N2, IN2), jnp.float32)
    rand2 = jax.random.uniform(k_adj2, (N2, N2))
    adj2 = ((rand2 + rand2.T) * 0.5 > 0.6).astype(jnp.float32)
    adj2 = adj2 * (1.0 - jnp.eye(N2))
    a_hat2 = normalize_adjacency(adj2)
    params2 = init_encoder_params(k_param2, IN2, HID2, 2)
    ref2 = encoder_reference(feat2, a_hat2, params2)
    out2 = jax.block_until_ready(
        encoder_forward(feat2, a_hat2, params2, allow_fused=False))
    assert out2.shape == (N2, HID2)
    _assert_close(out2, ref2, name="project-aggregate")

    # 4) corrupted pass (torch.randperm equivalent)
    k_perm = jax.random.PRNGKey(1)
    out_c = jax.block_until_ready(
        encoder_forward(features, a_hat, params, corrupt=True, key=k_perm))
    ref_c = encoder_reference(features, a_hat, params, corrupt=True, key=k_perm)
    assert out_c.shape == (N, N_HIDDEN)
    _assert_close(out_c, ref_c, name="corrupt")

    print("KERNEL_OK")
</pallas_src>

<mosaic_0001>
module attributes {stable_mosaic.version = 11 : i64} {
  func.func @_gcn_stack_kernel(%arg0: i32, %arg1: memref<16x16xbf16, #tpu.memory_space<vmem>>, %arg2: memref<16x128xf32, #tpu.memory_space<vmem>>, %arg3: memref<2x128x128xbf16, #tpu.memory_space<vmem>>, %arg4: memref<2x1x128xf32, #tpu.memory_space<vmem>>, %arg5: memref<2x1x128xf32, #tpu.memory_space<vmem>>, %arg6: memref<16x128xf32, #tpu.memory_space<vmem>>, %arg7: memref<16x128xf32, #tpu.memory_space<vmem>>) attributes {dimension_semantics = [#tpu.dimension_semantics<arbitrary>], iteration_bounds = array<i64: 1>, scalar_prefetch = 0 : i64, scratch_operands = 1 : i64, tpu.core_type = #tpu.core_type<tc>, window_params = [{pipeline_mode = #tpu.pipeline_mode<synchronous>, transform_indices = @transform_0, window_bounds = array<i64: 16, 16>}, {pipeline_mode = #tpu.pipeline_mode<synchronous>, transform_indices = @transform_1, window_bounds = array<i64: 16, 128>}, {pipeline_mode = #tpu.pipeline_mode<synchronous>, transform_indices = @transform_2, window_bounds = array<i64: 2, 128, 128>}, {pipeline_mode = #tpu.pipeline_mode<synchronous>, transform_indices = @transform_3, window_bounds = array<i64: 2, 1, 128>}, {pipeline_mode = #tpu.pipeline_mode<synchronous>, transform_indices = @transform_4, window_bounds = array<i64: 2, 1, 128>}, {pipeline_mode = #tpu.pipeline_mode<synchronous>, transform_indices = @transform_5, window_bounds = array<i64: 16, 128>}]} {
    %c0 = arith.constant 0 : index
    %c0_0 = arith.constant 0 : index
    %0 = vector.load %arg2[%c0, %c0_0] : memref<16x128xf32, #tpu.memory_space<vmem>>, vector<16x128xf32>
    %c0_1 = arith.constant 0 : index
    %c0_2 = arith.constant 0 : index
    %1 = vector.load %arg7[%c0_1, %c0_2] : memref<16x128xf32, #tpu.memory_space<vmem>>, vector<16x128xf32>
    tpu.vector_store %arg7[%c0_1, %c0_2], %0 {strides = array<i32>} : memref<16x128xf32, #tpu.memory_space<vmem>>, vector<16x128xf32>,
    %c0_3 = arith.constant 0 : index
    %c0_4 = arith.constant 0 : index
    %2 = vector.load %arg7[%c0_3, %c0_4] : memref<16x128xf32, #tpu.memory_space<vmem>>, vector<16x128xf32>
    %3 = arith.truncf %2 : vector<16x128xf32> to vector<16x128xbf16>
    %c0_5 = arith.constant 0 : index
    %c0_6 = arith.constant 0 : index
    %4 = vector.load %arg1[%c0_5, %c0_6] : memref<16x16xbf16, #tpu.memory_space<vmem>>, vector<16x16xbf16>
    %cst = arith.constant dense<0.000000e+00> : vector<16x128xf32>
    %5 = tpu.matmul %4, %3, %cst {dimension_numbers = #tpu.dot_dimension_numbers<[1], [0], [0], [1], [0, 0, 1, 1], [], []>} : vector<16x16xbf16>, vector<16x128xbf16>, vector<16x128xf32> -> vector<16x128xf32>
    %6 = arith.truncf %5 : vector<16x128xf32> to vector<16x128xbf16>
    %c0_7 = arith.constant 0 : index
    %c0_8 = arith.constant 0 : index
    %c0_9 = arith.constant 0 : index
    %7 = vector.load %arg3[%c0_7, %c0_8, %c0_9] : memref<2x128x128xbf16, #tpu.memory_space<vmem>>, vector<1x128x128xbf16>
    %8 = vector.shape_cast %7 : vector<1x128x128xbf16> to vector<128x128xbf16>
    %cst_10 = arith.constant dense<0.000000e+00> : vector<16x128xf32>
    %9 = tpu.matmul %6, %8, %cst_10 {dimension_numbers = #tpu.dot_dimension_numbers<[1], [0], [0], [1], [0, 0, 1, 1], [], []>} : vector<16x128xbf16>, vector<128x128xbf16>, vector<16x128xf32> -> vector<16x128xf32>
    %c0_11 = arith.constant 0 : index
    %c0_12 = arith.constant 0 : index
    %c0_13 = arith.constant 0 : index
    %10 = vector.load %arg4[%c0_11, %c0_12, %c0_13] : memref<2x1x128xf32, #tpu.memory_space<vmem>>, vector<1x1x128xf32>
    %11 = vector.shape_cast %10 : vector<1x1x128xf32> to vector<1x128xf32>
    %12 = vector.broadcast %11 : vector<1x128xf32> to vector<16x128xf32>
    %13 = arith.addf %9, %12 : vector<16x128xf32>
    %cst_14 = arith.constant 0.000000e+00 : f32
    %14 = vector.broadcast %cst_14 : f32 to vector<16x128xf32>
    %15 = arith.cmpf ogt, %13, %14 : vector<16x128xf32>
    %c0_15 = arith.constant 0 : index
    %c0_16 = arith.constant 0 : index
    %c0_17 = arith.constant 0 : index
    %16 = vector.load %arg5[%c0_15, %c0_16, %c0_17] : memref<2x1x128xf32, #tpu.memory_space<vmem>>, vector<1x1x128xf32>
    %17 = vector.shape_cast %16 : vector<1x1x128xf32> to vector<1x128xf32>
    %18 = vector.broadcast %17 : vector<1x128xf32> to vector<16x128xf32>
    %19 = arith.mulf %18, %13 : vector<16x128xf32>
    %20 = arith.select %15, %13, %19 : vector<16x128xi1>, vector<16x128xf32>
    %c0_18 = arith.constant 0 : index
    %c0_19 = arith.constant 0 : index
    %21 = vector.load %arg7[%c0_18, %c0_19] : memref<16x128xf32, #tpu.memory_space<vmem>>, vector<16x128xf32>
    tpu.vector_store %arg7[%c0_18, %c0_19], %20 {strides = array<i32>} : memref<16x128xf32, #tpu.memory_space<vmem>>, vector<16x128xf32>,
    %c0_20 = arith.constant 0 : index
    %c0_21 = arith.constant 0 : index
    %22 = vector.load %arg7[%c0_20, %c0_21] : memref<16x128xf32, #tpu.memory_space<vmem>>, vector<16x128xf32>
    %23 = arith.truncf %22 : vector<16x128xf32> to vector<16x128xbf16>
    %c0_22 = arith.constant 0 : index
    %c0_23 = arith.constant 0 : index
    %24 = vector.load %arg1[%c0_22, %c0_23] : memref<16x16xbf16, #tpu.memory_space<vmem>>, vector<16x16xbf16>
    %cst_24 = arith.constant dense<0.000000e+00> : vector<16x128xf32>
    %25 = tpu.matmul %24, %23, %cst_24 {dimension_numbers = #tpu.dot_dimension_numbers<[1], [0], [0], [1], [0, 0, 1, 1], [], []>} : vector<16x16xbf16>, vector<16x128xbf16>, vector<16x128xf32> -> vector<16x128xf32>
    %26 = arith.truncf %25 : vector<16x128xf32> to vector<16x128xbf16>
    %c1 = arith.constant 1 : index
    %c0_25 = arith.constant 0 : index
    %c0_26 = arith.constant 0 : index
    %27 = vector.load %arg3[%c1, %c0_25, %c0_26] : memref<2x128x128xbf16, #tpu.memory_space<vmem>>, vector<1x128x128xbf16>
    %28 = vector.shape_cast %27 : vector<1x128x128xbf16> to vector<128x128xbf16>
    %cst_27 = arith.constant dense<0.000000e+00> : vector<16x128xf32>
    %29 = tpu.matmul %26, %28, %cst_27 {dimension_numbers = #tpu.dot_dimension_numbers<[1], [0], [0], [1], [0, 0, 1, 1], [], []>} : vector<16x128xbf16>, vector<128x128xbf16>, vector<16x128xf32> -> vector<16x128xf32>
    %c1_28 = arith.constant 1 : index
    %c0_29 = arith.constant 0 : index
    %c0_30 = arith.constant 0 : index
    %30 = vector.load %arg4[%c1_28, %c0_29, %c0_30] : memref<2x1x128xf32, #tpu.memory_space<vmem>>, vector<1x1x128xf32>
    %31 = vector.shape_cast %30 : vector<1x1x128xf32> to vector<1x128xf32>
    %32 = vector.broadcast %31 : vector<1x128xf32> to vector<16x128xf32>
    %33 = arith.addf %29, %32 : vector<16x128xf32>
    %cst_31 = arith.constant 0.000000e+00 : f32
    %34 = vector.broadcast %cst_31 : f32 to vector<16x128xf32>
    %35 = arith.cmpf ogt, %33, %34 : vector<16x128xf32>
    %c1_32 = arith.constant 1 : index
    %c0_33 = arith.constant 0 : index
    %c0_34 = arith.constant 0 : index
    %36 = vector.load %arg5[%c1_32, %c0_33, %c0_34] : memref<2x1x128xf32, #tpu.memory_space<vmem>>, vector<1x1x128xf32>
    %37 = vector.shape_cast %36 : vector<1x1x128xf32> to vector<1x128xf32>
    %38 = vector.broadcast %37 : vector<1x128xf32> to vector<16x128xf32>
    %39 = arith.mulf %38, %33 : vector<16x128xf32>
    %40 = arith.select %35, %33, %39 : vector<16x128xi1>, vector<16x128xf32>
    %c0_35 = arith.constant 0 : index
    %c0_36 = arith.constant 0 : index
    %41 = vector.load %arg7[%c0_35, %c0_36] : memref<16x128xf32, #tpu.memory_space<vmem>>, vector<16x128xf32>
    tpu.vector_store %arg7[%c0_35, %c0_36], %40 {strides = array<i32>} : memref<16x128xf32, #tpu.memory_space<vmem>>, vector<16x128xf32>,
    %c0_37 = arith.constant 0 : index
    %c0_38 = arith.constant 0 : index
    %42 = vector.load %arg7[%c0_37, %c0_38] : memref<16x128xf32, #tpu.memory_space<vmem>>, vector<16x128xf32>
    %c0_39 = arith.constant 0 : index
    %c0_40 = arith.constant 0 : index
    %43 = vector.load %arg6[%c0_39, %c0_40] : memref<16x128xf32, #tpu.memory_space<vmem>>, vector<16x128xf32>
    tpu.vector_store %arg6[%c0_39, %c0_40], %42 {strides = array<i32>} : memref<16x128xf32, #tpu.memory_space<vmem>>, vector<16x128xf32>,
    return
  }
  func.func @transform_0(%arg0: i32) -> (i32, i32) {
    %c0_i32 = arith.constant 0 : i32
    %c0_i32_0 = arith.constant 0 : i32
    %c0_i32_1 = arith.constant 0 : i32
    return %c0_i32, %c0_i32_0 : i32, i32
  }
  func.func @transform_1(%arg0: i32) -> (i32, i32) {
    %c0_i32 = arith.constant 0 : i32
    %c0_i32_0 = arith.constant 0 : i32
    %c0_i32_1 = arith.constant 0 : i32
    return %c0_i32, %c0_i32_0 : i32, i32
  }
  func.func @transform_2(%arg0: i32) -> (i32, i32, i32) {
    %c0_i32 = arith.constant 0 : i32
    %c0_i32_0 = arith.constant 0 : i32
    %c0_i32_1 = arith.constant 0 : i32
    %c0_i32_2 = arith.constant 0 : i32
    return %c0_i32, %c0_i32_0, %c0_i32_1 : i32, i32, i32
  }
  func.func @transform_3(%arg0: i32) -> (i32, i32, i32) {
    %c0_i32 = arith.constant 0 : i32
    %c0_i32_0 = arith.constant 0 : i32
    %c0_i32_1 = arith.constant 0 : i32
    %c0_i32_2 = arith.constant 0 : i32
    return %c0_i32, %c0_i32_0, %c0_i32_1 : i32, i32, i32
  }
  func.func @transform_4(%arg0: i32) -> (i32, i32, i32) {
    %c0_i32 = arith.constant 0 : i32
    %c0_i32_0 = arith.constant 0 : i32
    %c0_i32_1 = arith.constant 0 : i32
    %c0_i32_2 = arith.constant 0 : i32
    return %c0_i32, %c0_i32_0, %c0_i32_1 : i32, i32, i32
  }
  func.func @transform_5(%arg0: i32) -> (i32, i32) {
    %c0_i32 = arith.constant 0 : i32
    %c0_i32_0 = arith.constant 0 : i32
    %c0_i32_1 = arith.constant 0 : i32
    return %c0_i32, %c0_i32_0 : i32, i32
  }
}

</mosaic_0001>

<llo_original>
// kernel: tpu_custom_call.1
$region0: #{tpu_custom_call.1}
  #allocation0 [shape = 'u32[]', space=smem, size = 0x4, offset = 0x4, fixed_abs, tag = 'smem constant byte address 0x4 - core index']
  #allocation1 [shape = 'u32[144,128]{1,0:T(1,128)}', space=vmem, size = 0x12000, scoped, tag = 'internal scratch']
  #allocation2 [shape = 'f32[16,128]{1,0:T(8,128)}', space=vmem, size = 0x2000, scoped, tag = 'scratch operand']
  %s0 = inlined_call_operand.hbm [shape: bf16[16,16], index: 0, kind: input, shape index: {}]
  %s1 = inlined_call_operand.hbm [shape: f32[16,128], index: 1, kind: input, shape index: {}]
  %s2 = inlined_call_operand.hbm [shape: bf16[2,128,128], index: 2, kind: input, shape index: {}]
  %s3 = inlined_call_operand.vmem [shape: f32[2,1,128], index: 3, kind: input, shape index: {}]
  %s4 = inlined_call_operand.vmem [shape: f32[2,1,128], index: 4, kind: input, shape index: {}]
  %s5 = inlined_call_operand.hbm [shape: f32[16,128], index: 5, kind: output, shape index: {}]
  %s6 = sld [smem:[#allocation0]]
  $region42: #{tpu_custom_call.1} parent=0
    _
  %s8 = ssub.s32 1, %s6
  %s9 = scalar_select 0, %s8, %s6
  $region1: #{tpu_custom_call.1} parent=0
    #allocation3 [shape = 'u8[4096]{0}', space=vmem, size = 0x1000, scoped, tag = 'input window, operand 0, single buffered']
    #allocation4 [shape = 's32[1]{0}', space=sflag, size = 0x4, scoped, tag = 'scoped memory for tpu_custom_call.1']
    #allocation5 [shape = 's32[1]{0}', space=sflag, size = 0x4, scoped, tag = 'scoped memory for tpu_custom_call.1']
    #allocation6 [shape = 'u8[8192]{0}', space=vmem, size = 0x2000, scoped, tag = 'input window, operand 1, single buffered']
    #allocation7 [shape = 's32[1]{0}', space=sflag, size = 0x4, scoped, tag = 'scoped memory for tpu_custom_call.1']
    #allocation8 [shape = 'u8[65536]{0}', space=vmem, size = 0x10000, scoped, tag = 'input window, operand 2, single buffered']
    #allocation9 [shape = 'u8[8192]{0}', space=vmem, size = 0x2000, scoped, tag = 'output window, operand 0, single buffered']
    %10 = vsyncpa [#allocation4], 0
    %11 = vsyncpa [#allocation7], 0
    %12 = vsyncpa [#allocation5], 0
    // Predicated region
    $region2: #{tpu_custom_call.1} parent=1 // pred_check
      _
    $region3: #{tpu_custom_call.1} parent=1 // pred_check_branch
      %14 = sbr.rel (0) target = $region5
    $region4: #{tpu_custom_call.1} parent=1 // pred_region
      %s16 = ssub.s32 128, 128
      %17 = vsyncadd [#allocation4], %s16
      %s18 = sshll.u32 [#allocation3], 4
      %s19 = int_to_ptr.vmem [resolvable:$true] %s18
      %24 = dma.hbm_to_vmem [thread:$0]  %s0, 128, %s19, [#allocation4], 64, 64, 4
    $region5: #{tpu_custom_call.1} parent=1 // pred_fallthru
      _
    // Predicated region
    $region6: #{tpu_custom_call.1} parent=1 // pred_check
      _
    $region7: #{tpu_custom_call.1} parent=1 // pred_check_branch
      %26 = sbr.rel (0) target = $region9
    $region8: #{tpu_custom_call.1} parent=1 // pred_region
      %s28 = ssub.s32 256, 256
      %29 = vsyncadd [#allocation7], %s28
      %s30 = sshll.u32 [#allocation6], 4
      %s31 = int_to_ptr.vmem [resolvable:$true] %s30
      %36 = dma.hbm_to_vmem [thread:$0]  %s1, 256, %s31, [#allocation7], 128, 128, 8
    $region9: #{tpu_custom_call.1} parent=1 // pred_fallthru
      _
    // Predicated region
    $region10: #{tpu_custom_call.1} parent=1 // pred_check
      _
    $region11: #{tpu_custom_call.1} parent=1 // pred_check_branch
      %38 = sbr.rel (0) target = $region13
    $region12: #{tpu_custom_call.1} parent=1 // pred_region
      %s40 = ssub.s32 2048, 2048
      %41 = vsyncadd [#allocation7], %s40
      %s42 = sshll.u32 [#allocation8], 4
      %s43 = int_to_ptr.vmem [resolvable:$true] %s42
      %48 = dma.hbm_to_vmem [thread:$0]  %s2, 2048, %s43, [#allocation7], 64, 64, 4
    $region13: #{tpu_custom_call.1} parent=1 // pred_fallthru
      _
    // Predicated region
    $region14: #{tpu_custom_call.1} parent=1 // pred_check
      _
    $region15: #{tpu_custom_call.1} parent=1 // pred_check_branch
      %50 = sbr.rel (0) target = $region17
    $region16: #{tpu_custom_call.1} parent=1 // pred_region
      _
    $region17: #{tpu_custom_call.1} parent=1 // pred_fallthru
      _
    // Predicated region
    $region18: #{tpu_custom_call.1} parent=1 // pred_check
      _
    $region19: #{tpu_custom_call.1} parent=1 // pred_check_branch
      %52 = sbr.rel (0) target = $region21
    $region20: #{tpu_custom_call.1} parent=1 // pred_region
      _
    $region21: #{tpu_custom_call.1} parent=1 // pred_fallthru
      _
    // Predicated region
    $region22: #{tpu_custom_call.1} parent=1 // pred_check
      _
    $region23: #{tpu_custom_call.1} parent=1 // pred_check_branch
      %54 = sbr.rel (0) target = $region25
    $region24: #{tpu_custom_call.1} parent=1 // pred_region
      %55 = dma.done [#allocation4], 128
    $region25: #{tpu_custom_call.1} parent=1 // pred_fallthru
      _
    // Predicated region
    $region26: #{tpu_custom_call.1} parent=1 // pred_check
      _
    $region27: #{tpu_custom_call.1} parent=1 // pred_check_branch
      %57 = sbr.rel (0) target = $region29
    $region28: #{tpu_custom_call.1} parent=1 // pred_region
      %58 = dma.done [#allocation7], 256
    $region29: #{tpu_custom_call.1} parent=1 // pred_fallthru
      _
    // Predicated region
    $region30: #{tpu_custom_call.1} parent=1 // pred_check
      _
    $region31: #{tpu_custom_call.1} parent=1 // pred_check_branch
      %60 = sbr.rel (0) target = $region33
    $region32: #{tpu_custom_call.1} parent=1 // pred_region
      %61 = dma.done [#allocation7], 2048
    $region33: #{tpu_custom_call.1} parent=1 // pred_fallthru
      _
    %v63 = vld [vmem:[#allocation6] sm:$0xff]
    %v64 = vld [vmem:[#allocation6 + $0x8] sm:$0xff]
    %65 = vst [vmem:[#allocation2] sm:$0xff] %v63
    %66 = vst [vmem:[#allocation2 + $0x8] sm:$0xff] %v64
    %v67 = vld [vmem:[#allocation2] sm:$0xff]
    %v68 = vld [vmem:[#allocation2 + $0x8] sm:$0xff]
    %v69 = vpack.c.bf16 %v68, %v67
    %v70 = vld [vmem:[#allocation3] sm:$0xf]
    %v71 = vld [vmem:[#allocation3 + $0x4] sm:$0xf]
    %v74 = vunpack.c.l.b16 %v70
    %v75 = vunpack.c.l.b16 %v71
    %v76 = vpack.c.b16 %v75, %v74
    %vm77 = vcmask 130048
    %v79 = vsel %vm77, %v76, 0
    %81 = vmatprep.subr.bf16.mxu0 0
    %82 = vmatpush1.bf16.msra.mxu0 0
    %83 = vmatprep.subr.bf16.mxu0 0
    %84 = vmatpush1.bf16.msra.mxu0 0
    %85 = vmatprep.subr.bf16.mxu0 0
    %86 = vmatpush1.bf16.msra.mxu0 0
    %87 = vmatprep.subr.bf16.mxu0 0
    %88 = vmatpush1.bf16.msra.mxu0 0
    %89 = vmatprep.subr.bf16.mxu0 0
    %90 = vmatpush1.bf16.msra.mxu0 0
    %91 = vmatprep.subr.bf16.mxu0 0
    %92 = vmatpush1.bf16.msra.mxu0 0
    %93 = vmatprep.subr.bf16.mxu0 0
    %94 = vmatpush1.bf16.msra.mxu0 0
    %95 = vmatprep.subr.bf16.mxu0 0
    %96 = vmatpush1.bf16.msra.mxu0 %v69
    %97 = vmatprep.subr.bf16.mxu0 0
    %98 = vmatpush2.bf16.msra.mxu0 0
    %99 = vmatprep.subr.bf16.mxu0 0
    %100 = vmatpush2.bf16.msra.mxu0 0
    %101 = vmatprep.subr.bf16.mxu0 0
    %102 = vmatpush2.bf16.msra.mxu0 0
    %103 = vmatprep.subr.bf16.mxu0 0
    %104 = vmatpush2.bf16.msra.mxu0 0
    %105 = vmatprep.subr.bf16.mxu0 0
    %106 = vmatpush2.bf16.msra.mxu0 0
    %107 = vmatprep.subr.bf16.mxu0 0
    %108 = vmatpush2.bf16.msra.mxu0 0
    %109 = vmatprep.subr.bf16.mxu0 0
    %110 = vmatpush2.bf16.msra.mxu0 0
    %111 = vmatprep.subr.bf16.mxu0 0
    %112 = vmatpush2.bf16.msra.mxu0 0
    %113 = vmatprep.mubr.bf16.mxu0 0
    %114 = vmatmul.mubr.bf16.gmra.mxu0 %v79
    %v115 = vpop.f32.mrf.mxu0
    %v116 = vadd.f32 0.0, %v115
    %v117 = vpop.f32.mrf.mxu0
    %v118 = vpop.f32.mrf.mxu0
    %v119 = vadd.f32 0.0, %v118
    %v120 = vpop.f32.mrf.mxu0
    %121 = vdwg.mxu0
    %v122 = vpack.c.bf16 %v119, %v116
    %v123 = vld [vmem:[#allocation8] sm:$0xf]
    %v124 = vld [vmem:[#allocation8 + $0x4] sm:$0xf]
    %v125 = vld [vmem:[#allocation8 + $0x8] sm:$0xf]
    %v126 = vld [vmem:[#allocation8 + $0xc] sm:$0xf]
    %v127 = vld [vmem:[#allocation8 + $0x10] sm:$0xf]
    %v128 = vld [vmem:[#allocation8 + $0x14] sm:$0xf]
    %v129 = vld [vmem:[#allocation8 + $0x18] sm:$0xf]
    %v130 = vld [vmem:[#allocation8 + $0x1c] sm:$0xf]
    %v131 = vld [vmem:[#allocation8 + $0x20] sm:$0xf]
    %v132 = vld [vmem:[#allocation8 + $0x24] sm:$0xf]
    %v133 = vld [vmem:[#allocation8 + $0x28] sm:$0xf]
    %v134 = vld [vmem:[#allocation8 + $0x2c] sm:$0xf]
    %v135 = vld [vmem:[#allocation8 + $0x30] sm:$0xf]
    %v136 = vld [vmem:[#allocation8 + $0x34] sm:$0xf]
    %v137 = vld [vmem:[#allocation8 + $0x38] sm:$0xf]
    %v138 = vld [vmem:[#allocation8 + $0x3c] sm:$0xf]
    %v139 = vld [vmem:[%s3] sm:$0x1]
    %v141 = vlaneseq
    %v142 = vshrl.u32 %v141, 7
    %v143 = vsub.s32 0, %v142
    %v144 = vrot.slane %v139, %v143
    %v162 = vunpack.c.l.b16 %v123
    %v163 = vunpack.c.l.b16 %v124
    %v164 = vunpack.c.l.b16 %v125
    %v165 = vunpack.c.l.b16 %v126
    %v166 = vunpack.c.l.b16 %v127
    %v167 = vunpack.c.l.b16 %v128
    %v168 = vunpack.c.l.b16 %v129
    %v169 = vunpack.c.l.b16 %v130
    %v170 = vunpack.c.l.b16 %v131
    %v171 = vunpack.c.l.b16 %v132
    %v172 = vunpack.c.l.b16 %v133
    %v173 = vunpack.c.l.b16 %v134
    %v174 = vunpack.c.l.b16 %v135
    %v175 = vunpack.c.l.b16 %v136
    %v176 = vunpack.c.l.b16 %v137
    %v177 = vunpack.c.l.b16 %v138
    %v178 = vpack.c.b16 %v163, %v162
    %v179 = vpack.c.b16 %v165, %v164
    %v180 = vpack.c.b16 %v167, %v166
    %v181 = vpack.c.b16 %v169, %v168
    %v182 = vpack.c.b16 %v171, %v170
    %v183 = vpack.c.b16 %v173, %v172
    %v184 = vpack.c.b16 %v175, %v174
    %v185 = vpack.c.b16 %v177, %v176
    %194 = vmatprep.subr.bf16.mxu0 0
    %195 = vmatpush1.bf16.msra.mxu0 %v185
    %196 = vmatprep.subr.bf16.mxu0 0
    %197 = vmatpush1.bf16.msra.mxu0 %v184
    %198 = vmatprep.subr.bf16.mxu0 0
    %199 = vmatpush1.bf16.msra.mxu0 %v183
    %200 = vmatprep.subr.bf16.mxu0 0
    %201 = vmatpush1.bf16.msra.mxu0 %v182
    %202 = vmatprep.subr.bf16.mxu0 0
    %203 = vmatpush1.bf16.msra.mxu0 %v181
    %204 = vmatprep.subr.bf16.mxu0 0
    %205 = vmatpush1.bf16.msra.mxu0 %v180
    %206 = vmatprep.subr.bf16.mxu0 0
    %207 = vmatpush1.bf16.msra.mxu0 %v179
    %208 = vmatprep.subr.bf16.mxu0 0
    %209 = vmatpush1.bf16.msra.mxu0 %v178
    %210 = vmatprep.subr.bf16.mxu0 0
    %211 = vmatpush2.bf16.msra.mxu0 0
    %212 = vmatprep.subr.bf16.mxu0 0
    %213 = vmatpush2.bf16.msra.mxu0 0
    %214 = vmatprep.subr.bf16.mxu0 0
    %215 = vmatpush2.bf16.msra.mxu0 0
    %216 = vmatprep.subr.bf16.mxu0 0
    %217 = vmatpush2.bf16.msra.mxu0 0
    %218 = vmatprep.subr.bf16.mxu0 0
    %219 = vmatpush2.bf16.msra.mxu0 0
    %220 = vmatprep.subr.bf16.mxu0 0
    %221 = vmatpush2.bf16.msra.mxu0 0
    %222 = vmatprep.subr.bf16.mxu0 0
    %223 = vmatpush2.bf16.msra.mxu0 0
    %224 = vmatprep.subr.bf16.mxu0 0
    %225 = vmatpush2.bf16.msra.mxu0 0
    %226 = vmatprep.mubr.bf16.mxu0 0
    %227 = vmatmul.mubr.bf16.gmra.mxu0 %v122
    %v228 = vpop.f32.mrf.mxu0
    %v229 = vadd.f32 %v144, %v228
    %v230 = vpop.f32.mrf.mxu0
    %v231 = vpop.f32.mrf.mxu0
    %v232 = vadd.f32 %v144, %v231
    %v233 = vpop.f32.mrf.mxu0
    %234 = vdwg.mxu0
    %vm235 = vcmp.gt.f32.partialorder %v229, 0.0
    %vm236 = vcmp.gt.f32.partialorder %v232, 0.0
    %v237 = vld [vmem:[%s4] sm:$0x1]
    %v239 = vlaneseq
    %v240 = vshrl.u32 %v239, 7
    %v241 = vsub.s32 0, %v240
    %v242 = vrot.slane %v237, %v241
    %v244 = vmul.f32 %v242, %v229
    %v245 = vmul.f32 %v242, %v232
    %v246 = vsel %vm235, %v229, %v244
    %v247 = vsel %vm236, %v232, %v245
    %248 = vst [vmem:[#allocation2] sm:$0xff] %v246
    %249 = vst [vmem:[#allocation2 + $0x8] sm:$0xff] %v247
    %v250 = vld [vmem:[#allocation2] sm:$0xff]
    %v251 = vld [vmem:[#allocation2 + $0x8] sm:$0xff]
    %v252 = vpack.c.bf16 %v251, %v250
    %v253 = vld [vmem:[#allocation3] sm:$0xf]
    %v254 = vld [vmem:[#allocation3 + $0x4] sm:$0xf]
    %v257 = vunpack.c.l.b16 %v253
    %v258 = vunpack.c.l.b16 %v254
    %v259 = vpack.c.b16 %v258, %v257
    %v261 = vsel %vm77, %v259, 0
    %263 = vmatprep.subr.bf16.mxu0 0
    %264 = vmatpush1.bf16.msra.mxu0 0
    %265 = vmatprep.subr.bf16.mxu0 0
    %266 = vmatpush1.bf16.msra.mxu0 0
    %267 = vmatprep.subr.bf16.mxu0 0
    %268 = vmatpush1.bf16.msra.mxu0 0
    %269 = vmatprep.subr.bf16.mxu0 0
    %270 = vmatpush1.bf16.msra.mxu0 0
    %271 = vmatprep.subr.bf16.mxu0 0
    %272 = vmatpush1.bf16.msra.mxu0 0
    %273 = vmatprep.subr.bf16.mxu0 0
    %274 = vmatpush1.bf16.msra.mxu0 0
    %275 = vmatprep.subr.bf16.mxu0 0
    %276 = vmatpush1.bf16.msra.mxu0 0
    %277 = vmatprep.subr.bf16.mxu0 0
    %278 = vmatpush1.bf16.msra.mxu0 %v252
    %279 = vmatprep.subr.bf16.mxu0 0
    %280 = vmatpush2.bf16.msra.mxu0 0
    %281 = vmatprep.subr.bf16.mxu0 0
    %282 = vmatpush2.bf16.msra.mxu0 0
    %283 = vmatprep.subr.bf16.mxu0 0
    %284 = vmatpush2.bf16.msra.mxu0 0
    %285 = vmatprep.subr.bf16.mxu0 0
    %286 = vmatpush2.bf16.msra.mxu0 0
    %287 = vmatprep.subr.bf16.mxu0 0
    %288 = vmatpush2.bf16.msra.mxu0 0
    %289 = vmatprep.subr.bf16.mxu0 0
    %290 = vmatpush2.bf16.msra.mxu0 0
    %291 = vmatprep.subr.bf16.mxu0 0
    %292 = vmatpush2.bf16.msra.mxu0 0
    %293 = vmatprep.subr.bf16.mxu0 0
    %294 = vmatpush2.bf16.msra.mxu0 0
    %295 = vmatprep.mubr.bf16.mxu0 0
    %296 = vmatmul.mubr.bf16.gmra.mxu0 %v261
    %v297 = vpop.f32.mrf.mxu0
    %v298 = vadd.f32 0.0, %v297
    %v299 = vpop.f32.mrf.mxu0
    %v300 = vpop.f32.mrf.mxu0
    %v301 = vadd.f32 0.0, %v300
    %v302 = vpop.f32.mrf.mxu0
    %303 = vdwg.mxu0
    %v304 = vpack.c.bf16 %v301, %v298
    %s305 = scalar_lea.vmem [#allocation8], 64
    %v306 = vld [vmem:[%s305] sm:$0xf]
    %v307 = vld [vmem:[%s305 + $0x4] sm:$0xf]
    %v308 = vld [vmem:[%s305 + $0x8] sm:$0xf]
    %v309 = vld [vmem:[%s305 + $0xc] sm:$0xf]
    %v310 = vld [vmem:[%s305 + $0x10] sm:$0xf]
    %v311 = vld [vmem:[%s305 + $0x14] sm:$0xf]
    %v312 = vld [vmem:[%s305 + $0x18] sm:$0xf]
    %v313 = vld [vmem:[%s305 + $0x1c] sm:$0xf]
    %v314 = vld [vmem:[%s305 + $0x20] sm:$0xf]
    %v315 = vld [vmem:[%s305 + $0x24] sm:$0xf]
    %v316 = vld [vmem:[%s305 + $0x28] sm:$0xf]
    %v317 = vld [vmem:[%s305 + $0x2c] sm:$0xf]
    %v318 = vld [vmem:[%s305 + $0x30] sm:$0xf]
    %v319 = vld [vmem:[%s305 + $0x34] sm:$0xf]
    %v320 = vld [vmem:[%s305 + $0x38] sm:$0xf]
    %v321 = vld [vmem:[%s305 + $0x3c] sm:$0xf]
    %s322 = scalar_lea.vmem %s3, 1
    %v323 = vld [vmem:[%s322] sm:$0x1]
    %v325 = vlaneseq
    %v326 = vshrl.u32 %v325, 7
    %v327 = vsub.s32 0, %v326
    %v328 = vrot.slane %v323, %v327
    %v346 = vunpack.c.l.b16 %v306
    %v347 = vunpack.c.l.b16 %v307
    %v348 = vunpack.c.l.b16 %v308
    %v349 = vunpack.c.l.b16 %v309
    %v350 = vunpack.c.l.b16 %v310
    %v351 = vunpack.c.l.b16 %v311
    %v352 = vunpack.c.l.b16 %v312
    %v353 = vunpack.c.l.b16 %v313
    %v354 = vunpack.c.l.b16 %v314
    %v355 = vunpack.c.l.b16 %v315
    %v356 = vunpack.c.l.b16 %v316
    %v357 = vunpack.c.l.b16 %v317
    %v358 = vunpack.c.l.b16 %v318
    %v359 = vunpack.c.l.b16 %v319
    %v360 = vunpack.c.l.b16 %v320
    %v361 = vunpack.c.l.b16 %v321
    %v362 = vpack.c.b16 %v347, %v346
    %v363 = vpack.c.b16 %v349, %v348
    %v364 = vpack.c.b16 %v351, %v350
    %v365 = vpack.c.b16 %v353, %v352
    %v366 = vpack.c.b16 %v355, %v354
    %v367 = vpack.c.b16 %v357, %v356
    %v368 = vpack.c.b16 %v359, %v358
    %v369 = vpack.c.b16 %v361, %v360
    %378 = vmatprep.subr.bf16.mxu0 0
    %379 = vmatpush1.bf16.msra.mxu0 %v369
    %380 = vmatprep.subr.bf16.mxu0 0
    %381 = vmatpush1.bf16.msra.mxu0 %v368
    %382 = vmatprep.subr.bf16.mxu0 0
    %383 = vmatpush1.bf16.msra.mxu0 %v367
    %384 = vmatprep.subr.bf16.mxu0 0
    %385 = vmatpush1.bf16.msra.mxu0 %v366
    %386 = vmatprep.subr.bf16.mxu0 0
    %387 = vmatpush1.bf16.msra.mxu0 %v365
    %388 = vmatprep.subr.bf16.mxu0 0
    %389 = vmatpush1.bf16.msra.mxu0 %v364
    %390 = vmatprep.subr.bf16.mxu0 0
    %391 = vmatpush1.bf16.msra.mxu0 %v363
    %392 = vmatprep.subr.bf16.mxu0 0
    %393 = vmatpush1.bf16.msra.mxu0 %v362
    %394 = vmatprep.subr.bf16.mxu0 0
    %395 = vmatpush2.bf16.msra.mxu0 0
    %396 = vmatprep.subr.bf16.mxu0 0
    %397 = vmatpush2.bf16.msra.mxu0 0
    %398 = vmatprep.subr.bf16.mxu0 0
    %399 = vmatpush2.bf16.msra.mxu0 0
    %400 = vmatprep.subr.bf16.mxu0 0
    %401 = vmatpush2.bf16.msra.mxu0 0
    %402 = vmatprep.subr.bf16.mxu0 0
    %403 = vmatpush2.bf16.msra.mxu0 0
    %404 = vmatprep.subr.bf16.mxu0 0
    %405 = vmatpush2.bf16.msra.mxu0 0
    %406 = vmatprep.subr.bf16.mxu0 0
    %407 = vmatpush2.bf16.msra.mxu0 0
    %408 = vmatprep.subr.bf16.mxu0 0
    %409 = vmatpush2.bf16.msra.mxu0 0
    %410 = vmatprep.mubr.bf16.mxu0 0
    %411 = vmatmul.mubr.bf16.gmra.mxu0 %v304
    %v412 = vpop.f32.mrf.mxu0
    %v413 = vadd.f32 %v328, %v412
    %v414 = vpop.f32.mrf.mxu0
    %v415 = vpop.f32.mrf.mxu0
    %v416 = vadd.f32 %v328, %v415
    %v417 = vpop.f32.mrf.mxu0
    %418 = vdwg.mxu0
    %vm419 = vcmp.gt.f32.partialorder %v413, 0.0
    %vm420 = vcmp.gt.f32.partialorder %v416, 0.0
    %s421 = scalar_lea.vmem %s4, 1
    %v422 = vld [vmem:[%s421] sm:$0x1]
    %v424 = vlaneseq
    %v425 = vshrl.u32 %v424, 7
    %v426 = vsub.s32 0, %v425
    %v427 = vrot.slane %v422, %v426
    %v429 = vmul.f32 %v427, %v413
    %v430 = vmul.f32 %v427, %v416
    %v431 = vsel %vm419, %v413, %v429
    %v432 = vsel %vm420, %v416, %v430
    %433 = vst [vmem:[#allocation2] sm:$0xff] %v431
    %434 = vst [vmem:[#allocation2 + $0x8] sm:$0xff] %v432
    %v435 = vld [vmem:[#allocation2] sm:$0xff]
    %v436 = vld [vmem:[#allocation2 + $0x8] sm:$0xff]
    %437 = vst [vmem:[#allocation9] sm:$0xff] %v435
    %438 = vst [vmem:[#allocation9 + $0x8] sm:$0xff] %v436
    // Predicated region
    $region34: #{tpu_custom_call.1} parent=1 // pred_check
      _
    $region35: #{tpu_custom_call.1} parent=1 // pred_check_branch
      %440 = sbr.rel (0) target = $region37
    $region36: #{tpu_custom_call.1} parent=1 // pred_region
      %s442 = ssub.s32 256, 256
      %443 = vsyncadd [#allocation5], %s442
      %s444 = sshll.u32 [#allocation9], 4
      %s445 = int_to_ptr.vmem [resolvable:$true] %s444
      %450 = dma.vmem_to_hbm [thread:$0]  %s445, 256, %s5, [#allocation5], 128, 128, 8
    $region37: #{tpu_custom_call.1} parent=1 // pred_fallthru
      _
    // Predicated region
    $region38: #{tpu_custom_call.1} parent=1 // pred_check
      _
    $region39: #{tpu_custom_call.1} parent=1 // pred_check_branch
      %452 = sbr.rel (0) target = $region41
    $region40: #{tpu_custom_call.1} parent=1 // pred_region
      %453 = dma.done [#allocation5], 256
    $region41: #{tpu_custom_call.1} parent=1 // pred_fallthru
      _
    %454 = vsyncpa [#allocation4], 1
    %455 = vsyncpa [#allocation7], 1
    %456 = vsyncpa [#allocation5], 1

</llo_original>
